<compile_context>
chip_gen: v7x
topology: tpu7x:2x2x1
jax: 0.10.0
libtpu: 0.0.40
codegen_flags: <defaults>
</compile_context>

<pallas_src>
import jax
import jax.numpy as jnp
from jax.experimental import pallas as pl
from jax.experimental.pallas import tpu as pltpu


def _ours_forward_kernel(g_ref, emb_ref, gamma_ref, acc_ref):
    """One (batch-tile, reduction-tile) grid step.

    g_ref    : (1, 2*TB, tk) bf16  gathered Graph rows: TB user rows stacked on
                                   top of TB item rows for this batch tile.
    emb_ref  : (tk, D)       bf16  shared all_emb reduction tile.
    gamma_ref: (1, 1, TB)    f32   lane-dense per-tile output (resident over k).
    acc_ref  : (2*TB, D)     f32   MXU accumulator, reset at k == 0.
    """
    k = pl.program_id(1)
    k_last = pl.num_programs(1) - 1

    @pl.when(k == 0)
    def _init():
        acc_ref[...] = jnp.zeros_like(acc_ref)

    # Fused (2*TB, tk) @ (tk, D) MXU matmul, f32 accumulation.
    acc_ref[...] += jnp.dot(g_ref[0], emb_ref[...],
                            preferred_element_type=jnp.float32)

    # After the last reduction tile:
    #   gamma[b] = <prop_user[b], prop_item[b]>   (VPU mult + XLU reduce, f32)
    @pl.when(k == k_last)
    def _finalize():
        tb = acc_ref.shape[0] // 2
        pu = acc_ref[:tb, :]                      # propagated users (TB, D)
        pi = acc_ref[tb:, :]                      # propagated items (TB, D)
        gamma = jnp.sum(pu * pi, axis=-1)         # (TB,) f32
        gamma_ref[...] = gamma.reshape(1, 1, tb)  # one unmasked lane-dense store


def _pick_reduction_tile(n_total, requested=None):
    if requested is not None:
        assert n_total % requested == 0 and requested % 128 == 0
        return requested
    for cand in (2048, 1024, 512, 256, 128):
        if n_total % cand == 0:
            return cand
    raise ValueError(f"N = {n_total} must be a multiple of 128")


def ours_forward(user_emb, item_emb, graph, users, items, *, tb=128, tk=None):
    """Pallas implementation of Ours.forward(users, items) -> gamma (B,)."""
    n_users, d = user_emb.shape
    m_items = item_emb.shape[0]
    n_total = n_users + m_items
    assert graph.shape == (n_total, n_total)
    assert d % 128 == 0, "latent_dim must be lane-dense (multiple of 128)"
    assert tb % 128 == 0, "batch tile must be lane-dense (multiple of 128)"
    tk = _pick_reduction_tile(n_total, tk)

    batch = users.shape[0]
    b_pad = max(tb, ((batch + tb - 1) // tb) * tb)
    nbt = b_pad // tb

    # One-time work outside the hot loop: concat, bf16 cast, row gather, tile
    # stacking.  Padded lanes gather row 0 and are sliced off at the end
    # (waste bounded to one partial tile).
    all_emb = jnp.concatenate([user_emb, item_emb], axis=0).astype(jnp.bfloat16)
    graph_bf16 = graph.astype(jnp.bfloat16)
    users_p = jnp.pad(users.astype(jnp.int32), (0, b_pad - batch))
    items_p = jnp.pad(items.astype(jnp.int32), (0, b_pad - batch))
    gu = graph_bf16[users_p]                     # (B_pad, N)
    gi = graph_bf16[n_users + items_p]           # (B_pad, N)
    g_pair = jnp.concatenate(                    # (nbt, 2*TB, N)
        [gu.reshape(nbt, tb, n_total), gi.reshape(nbt, tb, n_total)], axis=1)

    grid = (nbt, n_total // tk)

    cost = pl.CostEstimate(
        flops=2 * (2 * b_pad) * n_total * d,
        transcendentals=0,
        bytes_accessed=(2 * b_pad * n_total * 2      # gathered Graph rows (bf16)
                        + nbt * n_total * d * 2      # emb streamed per batch tile
                        + nbt * tb * 4),             # gamma output (f32)
    )

    gamma_tiles = pl.pallas_call(
        _ours_forward_kernel,
        out_shape=jax.ShapeDtypeStruct((nbt, 1, tb), jnp.float32),
        grid_spec=pltpu.PrefetchScalarGridSpec(
            num_scalar_prefetch=0,
            grid=grid,
            in_specs=[
                # Stacked user/item Graph rows for this batch tile.
                pl.BlockSpec((1, 2 * tb, tk), lambda bt, k: (bt, 0, k)),
                # Shared all_emb reduction tile.
                pl.BlockSpec((tk, d), lambda bt, k: (k, 0)),
            ],
            # Per-batch-tile lane-dense gamma block, resident over the k axis.
            out_specs=pl.BlockSpec((1, 1, tb), lambda bt, k: (bt, 0, 0)),
            scratch_shapes=[pltpu.VMEM((2 * tb, d), jnp.float32)],
        ),
        compiler_params=pltpu.CompilerParams(
            # Batch tiles are independent (own output block + own scratch) ->
            # parallel for megacore on v7x; reduction axis stays last/serial.
            dimension_semantics=("parallel", "arbitrary"),
            vmem_limit_bytes=64 * 1024 * 1024,
        ),
        cost_estimate=cost,
    )(g_pair, all_emb)

    return gamma_tiles.reshape(-1)[:batch]


def ours_forward_reference(user_emb, item_emb, graph, users, items):
    """Pure-JAX reference with the same bf16-rounded inputs, f32 math."""
    n_users = user_emb.shape[0]
    all_emb = (jnp.concatenate([user_emb, item_emb], axis=0)
               .astype(jnp.bfloat16).astype(jnp.float32))
    g = graph.astype(jnp.bfloat16).astype(jnp.float32)
    prop = jnp.dot(g, all_emb, precision=jax.lax.Precision.HIGHEST)
    all_users, all_items = prop[:n_users], prop[n_users:]
    return jnp.sum(all_users[users] * all_items[items], axis=-1)


if __name__ == "__main__":
    key = jax.random.PRNGKey(0)
    n_users, m_items, latent_dim, batch = 192, 320, 128, 64
    n_total = n_users + m_items
    k1, k2, k3, k4, k5 = jax.random.split(key, 5)

    # Embedding tables (std=0.1, as in the PyTorch init).
    user_emb = 0.1 * jax.random.normal(k1, (n_users, latent_dim), jnp.float32)
    item_emb = 0.1 * jax.random.normal(k2, (m_items, latent_dim), jnp.float32)

    # Synthetic symmetric-normalized bipartite adjacency (dense stand-in for
    # dataset.getSparseGraph()):  A = D^-1/2 R D^-1/2.
    mask = (jax.random.uniform(k3, (n_users, m_items)) < 0.05).astype(jnp.float32)
    r = jnp.zeros((n_total, n_total), jnp.float32)
    r = r.at[:n_users, n_users:].set(mask)
    r = r.at[n_users:, :n_users].set(mask.T)
    deg = jnp.sum(r, axis=1)
    d_inv_sqrt = jnp.where(deg > 0, 1.0 / jnp.sqrt(jnp.maximum(deg, 1e-12)), 0.0)
    graph = r * d_inv_sqrt[:, None] * d_inv_sqrt[None, :]

    users = jax.random.randint(k4, (batch,), 0, n_users, jnp.int32)
    items = jax.random.randint(k5, (batch,), 0, m_items, jnp.int32)

    gamma = jax.block_until_ready(
        ours_forward(user_emb, item_emb, graph, users, items, tb=128))
    ref = jax.block_until_ready(
        ours_forward_reference(user_emb, item_emb, graph, users, items))

    if not bool(jnp.allclose(gamma, ref, rtol=1e-2, atol=1e-3)):
        raise AssertionError(
            f"mismatch vs reference, max abs err = {float(jnp.max(jnp.abs(gamma - ref)))}")
    print("KERNEL_OK")
</pallas_src>

<mosaic_0001>
module attributes {stable_mosaic.version = 11 : i64} {
  func.func @_ours_forward_kernel(%arg0: i32, %arg1: i32, %arg2: memref<1x256x512xbf16, #tpu.memory_space<vmem>>, %arg3: memref<512x128xbf16, #tpu.memory_space<vmem>>, %arg4: memref<1x1x128xf32, #tpu.memory_space<vmem>>, %arg5: memref<256x128xf32, #tpu.memory_space<vmem>>) attributes {dimension_semantics = [#tpu.dimension_semantics<parallel>, #tpu.dimension_semantics<arbitrary>], iteration_bounds = array<i64: 1, 1>, scalar_prefetch = 0 : i64, scratch_operands = 1 : i64, tpu.core_type = #tpu.core_type<tc>, window_params = [{transform_indices = @transform_0, window_bounds = array<i64: 1, 256, 512>}, {transform_indices = @transform_1, window_bounds = array<i64: 512, 128>}, {transform_indices = @transform_2, window_bounds = array<i64: 1, 1, 128>}]} {
    %c0_i32 = arith.constant 0 : i32
    %0 = arith.cmpi eq, %arg1, %c0_i32 : i32
    %1 = arith.extui %0 : i1 to i32
    %c0_i32_0 = arith.constant 0 : i32
    %2 = arith.cmpi ne, %1, %c0_i32_0 : i32
    scf.if %2 {
      %cst_11 = arith.constant 0.000000e+00 : f32
      %13 = vector.broadcast %cst_11 : f32 to vector<256x128xf32>
      %c0_12 = arith.constant 0 : index
      %c0_13 = arith.constant 0 : index
      %14 = vector.load %arg5[%c0_12, %c0_13] : memref<256x128xf32, #tpu.memory_space<vmem>>, vector<256x128xf32>
      tpu.vector_store %arg5[%c0_12, %c0_13], %13 {strides = array<i32>} : memref<256x128xf32, #tpu.memory_space<vmem>>, vector<256x128xf32>,
    } else {
    }
    %c0 = arith.constant 0 : index
    %c0_1 = arith.constant 0 : index
    %3 = vector.load %arg5[%c0, %c0_1] : memref<256x128xf32, #tpu.memory_space<vmem>>, vector<256x128xf32>
    %c0_2 = arith.constant 0 : index
    %c0_3 = arith.constant 0 : index
    %c0_4 = arith.constant 0 : index
    %4 = vector.load %arg2[%c0_2, %c0_3, %c0_4] : memref<1x256x512xbf16, #tpu.memory_space<vmem>>, vector<1x256x512xbf16>
    %5 = vector.shape_cast %4 : vector<1x256x512xbf16> to vector<256x512xbf16>
    %c0_5 = arith.constant 0 : index
    %c0_6 = arith.constant 0 : index
    %6 = vector.load %arg3[%c0_5, %c0_6] : memref<512x128xbf16, #tpu.memory_space<vmem>>, vector<512x128xbf16>
    %cst = arith.constant dense<0.000000e+00> : vector<256x128xf32>
    %7 = tpu.matmul %5, %6, %cst {dimension_numbers = #tpu.dot_dimension_numbers<[1], [0], [0], [1], [0, 0, 1, 1], [], []>} : vector<256x512xbf16>, vector<512x128xbf16>, vector<256x128xf32> -> vector<256x128xf32>
    %8 = arith.addf %3, %7 : vector<256x128xf32>
    %c0_7 = arith.constant 0 : index
    %c0_8 = arith.constant 0 : index
    %9 = vector.load %arg5[%c0_7, %c0_8] : memref<256x128xf32, #tpu.memory_space<vmem>>, vector<256x128xf32>
    tpu.vector_store %arg5[%c0_7, %c0_8], %8 {strides = array<i32>} : memref<256x128xf32, #tpu.memory_space<vmem>>, vector<256x128xf32>,
    %c0_i32_9 = arith.constant 0 : i32
    %10 = arith.cmpi eq, %arg1, %c0_i32_9 : i32
    %11 = arith.extui %10 : i1 to i32
    %c0_i32_10 = arith.constant 0 : i32
    %12 = arith.cmpi ne, %11, %c0_i32_10 : i32
    scf.if %12 {
      %c0_11 = arith.constant 0 : index
      %c0_12 = arith.constant 0 : index
      %13 = vector.load %arg5[%c0_11, %c0_12] : memref<256x128xf32, #tpu.memory_space<vmem>>, vector<128x128xf32>
      %c128 = arith.constant 128 : index
      %c0_13 = arith.constant 0 : index
      %14 = vector.load %arg5[%c128, %c0_13] : memref<256x128xf32, #tpu.memory_space<vmem>>, vector<128x128xf32>
      %15 = arith.mulf %13, %14 : vector<128x128xf32>
      %cst_14 = arith.constant dense<0.000000e+00> : vector<128xf32>
      %16 = vector.multi_reduction <add>, %15, %cst_14 [1] : vector<128x128xf32> to vector<128xf32>
      %17 = vector.shape_cast %16 : vector<128xf32> to vector<1x1x128xf32>
      %c0_15 = arith.constant 0 : index
      %c0_16 = arith.constant 0 : index
      %c0_17 = arith.constant 0 : index
      %18 = vector.load %arg4[%c0_15, %c0_16, %c0_17] : memref<1x1x128xf32, #tpu.memory_space<vmem>>, vector<1x1x128xf32>
      tpu.vector_store %arg4[%c0_15, %c0_16, %c0_17], %17 {strides = array<i32>} : memref<1x1x128xf32, #tpu.memory_space<vmem>>, vector<1x1x128xf32>,
    } else {
    }
    return
  }
  func.func @transform_0(%arg0: i32, %arg1: i32) -> (i32, i32, i32) {
    %c0_i32 = arith.constant 0 : i32
    %c0_i32_0 = arith.constant 0 : i32
    return %arg0, %c0_i32, %arg1 : i32, i32, i32
  }
  func.func @transform_1(%arg0: i32, %arg1: i32) -> (i32, i32) {
    %c0_i32 = arith.constant 0 : i32
    %c0_i32_0 = arith.constant 0 : i32
    return %arg1, %c0_i32 : i32, i32
  }
  func.func @transform_2(%arg0: i32, %arg1: i32) -> (i32, i32, i32) {
    %c0_i32 = arith.constant 0 : i32
    %c0_i32_0 = arith.constant 0 : i32
    %c0_i32_1 = arith.constant 0 : i32
    return %arg0, %c0_i32, %c0_i32_0 : i32, i32, i32
  }
}

</mosaic_0001>

<llo_original>
// kernel: tpu_custom_call.1
$region0: #{tpu_custom_call.1}
  #allocation0 [shape = 'u32[]', space=smem, size = 0x4, offset = 0x4, fixed_abs, tag = 'smem constant byte address 0x4 - core index']
  #allocation1 [shape = 'u32[144,128]{1,0:T(1,128)}', space=vmem, size = 0x12000, scoped, tag = 'internal scratch']
  #allocation2 [shape = 'f32[256,128]{1,0:T(8,128)}', space=vmem, size = 0x20000, scoped, tag = 'scratch operand']
  %s0 = inlined_call_operand.hbm [shape: bf16[1,256,512], index: 0, kind: input, shape index: {}]
  %s1 = inlined_call_operand.hbm [shape: bf16[512,128], index: 1, kind: input, shape index: {}]
  %s2 = inlined_call_operand.hbm [shape: f32[1,1,128], index: 2, kind: output, shape index: {}]
  %s3 = sld [smem:[#allocation0]]
  $region34: #{tpu_custom_call.1} parent=0
    _
  %s5 = ssub.s32 1, %s3
  %s6 = scalar_select 0, %s5, %s3
  $region1: #{tpu_custom_call.1} parent=0
    #allocation3 [shape = 'u8[262144]{0}', space=vmem, size = 0x40000, scoped, tag = 'input window, operand 0, single buffered']
    #allocation4 [shape = 's32[1]{0}', space=sflag, size = 0x4, scoped, tag = 'scoped memory for tpu_custom_call.1']
    #allocation5 [shape = 's32[1]{0}', space=sflag, size = 0x4, scoped, tag = 'scoped memory for tpu_custom_call.1']
    #allocation6 [shape = 'u8[131072]{0}', space=vmem, size = 0x20000, scoped, tag = 'input window, operand 1, single buffered']
    #allocation7 [shape = 's32[1]{0}', space=sflag, size = 0x4, scoped, tag = 'scoped memory for tpu_custom_call.1']
    #allocation8 [shape = 'u8[512]{0}', space=vmem, size = 0x400, scoped, tag = 'output window, operand 0, single buffered']
    %7 = vsyncpa [#allocation4], 0
    %8 = vsyncpa [#allocation7], 0
    %9 = vsyncpa [#allocation5], 0
    // Predicated region
    $region2: #{tpu_custom_call.1} parent=1 // pred_check
      _
    $region3: #{tpu_custom_call.1} parent=1 // pred_check_branch
      %11 = sbr.rel (0) target = $region5
    $region4: #{tpu_custom_call.1} parent=1 // pred_region
      %s13 = ssub.s32 8192, 8192
      %14 = vsyncadd [#allocation4], %s13
      %s15 = sshll.u32 [#allocation3], 4
      %s16 = int_to_ptr.vmem [resolvable:$true] %s15
      %21 = dma.hbm_to_vmem [thread:$0]  %s0, 8192, %s16, [#allocation4], 256, 256, 16
    $region5: #{tpu_custom_call.1} parent=1 // pred_fallthru
      _
    // Predicated region
    $region6: #{tpu_custom_call.1} parent=1 // pred_check
      _
    $region7: #{tpu_custom_call.1} parent=1 // pred_check_branch
      %23 = sbr.rel (0) target = $region9
    $region8: #{tpu_custom_call.1} parent=1 // pred_region
      %s25 = ssub.s32 4096, 4096
      %26 = vsyncadd [#allocation7], %s25
      %s27 = sshll.u32 [#allocation6], 4
      %s28 = int_to_ptr.vmem [resolvable:$true] %s27
      %33 = dma.hbm_to_vmem [thread:$0]  %s1, 4096, %s28, [#allocation7], 64, 64, 4
    $region9: #{tpu_custom_call.1} parent=1 // pred_fallthru
      _
    // Predicated region
    $region10: #{tpu_custom_call.1} parent=1 // pred_check
      _
    $region11: #{tpu_custom_call.1} parent=1 // pred_check_branch
      %35 = sbr.rel (0) target = $region13
    $region12: #{tpu_custom_call.1} parent=1 // pred_region
      %36 = dma.done [#allocation4], 8192
    $region13: #{tpu_custom_call.1} parent=1 // pred_fallthru
      _
    // Predicated region
    $region14: #{tpu_custom_call.1} parent=1 // pred_check
      _
    $region15: #{tpu_custom_call.1} parent=1 // pred_check_branch
      %38 = sbr.rel (0) target = $region17
    $region16: #{tpu_custom_call.1} parent=1 // pred_region
      %39 = dma.done [#allocation7], 4096
    $region17: #{tpu_custom_call.1} parent=1 // pred_fallthru
      _
    %p41 = scmp.eq.s32.totalorder 0, 0
    // Predicated region
    $region18: #{tpu_custom_call.1} parent=1 // pred_check
      %p42 = pneg %p41
    $region19: #{tpu_custom_call.1} parent=1 // pred_check_branch
      %44 = sbr.rel (%p42) target = $region21
    $region20: #{tpu_custom_call.1} parent=1 // pred_region
      %45 = vst [vmem:[#allocation2] sm:$0xff] 0.0
      %46 = vst [vmem:[#allocation2 + $0x8] sm:$0xff] 0.0
      %47 = vst [vmem:[#allocation2 + $0x10] sm:$0xff] 0.0
      %48 = vst [vmem:[#allocation2 + $0x18] sm:$0xff] 0.0
      %49 = vst [vmem:[#allocation2 + $0x20] sm:$0xff] 0.0
      %50 = vst [vmem:[#allocation2 + $0x28] sm:$0xff] 0.0
      %51 = vst [vmem:[#allocation2 + $0x30] sm:$0xff] 0.0
      %52 = vst [vmem:[#allocation2 + $0x38] sm:$0xff] 0.0
      %53 = vst [vmem:[#allocation2 + $0x40] sm:$0xff] 0.0
      %54 = vst [vmem:[#allocation2 + $0x48] sm:$0xff] 0.0
      %55 = vst [vmem:[#allocation2 + $0x50] sm:$0xff] 0.0
      %56 = vst [vmem:[#allocation2 + $0x58] sm:$0xff] 0.0
      %57 = vst [vmem:[#allocation2 + $0x60] sm:$0xff] 0.0
      %58 = vst [vmem:[#allocation2 + $0x68] sm:$0xff] 0.0
      %59 = vst [vmem:[#allocation2 + $0x70] sm:$0xff] 0.0
      %60 = vst [vmem:[#allocation2 + $0x78] sm:$0xff] 0.0
      %61 = vst [vmem:[#allocation2 + $0x80] sm:$0xff] 0.0
      %62 = vst [vmem:[#allocation2 + $0x88] sm:$0xff] 0.0
      %63 = vst [vmem:[#allocation2 + $0x90] sm:$0xff] 0.0
      %64 = vst [vmem:[#allocation2 + $0x98] sm:$0xff] 0.0
      %65 = vst [vmem:[#allocation2 + $0xa0] sm:$0xff] 0.0
      %66 = vst [vmem:[#allocation2 + $0xa8] sm:$0xff] 0.0
      %67 = vst [vmem:[#allocation2 + $0xb0] sm:$0xff] 0.0
      %68 = vst [vmem:[#allocation2 + $0xb8] sm:$0xff] 0.0
      %69 = vst [vmem:[#allocation2 + $0xc0] sm:$0xff] 0.0
      %70 = vst [vmem:[#allocation2 + $0xc8] sm:$0xff] 0.0
      %71 = vst [vmem:[#allocation2 + $0xd0] sm:$0xff] 0.0
      %72 = vst [vmem:[#allocation2 + $0xd8] sm:$0xff] 0.0
      %73 = vst [vmem:[#allocation2 + $0xe0] sm:$0xff] 0.0
      %74 = vst [vmem:[#allocation2 + $0xe8] sm:$0xff] 0.0
      %75 = vst [vmem:[#allocation2 + $0xf0] sm:$0xff] 0.0
      %76 = vst [vmem:[#allocation2 + $0xf8] sm:$0xff] 0.0
    $region21: #{tpu_custom_call.1} parent=1 // pred_fallthru
      _
    %v77 = vld [vmem:[#allocation2] sm:$0xff]
    %v78 = vld [vmem:[#allocation2 + $0x8] sm:$0xff]
    %v79 = vld [vmem:[#allocation2 + $0x10] sm:$0xff]
    %v80 = vld [vmem:[#allocation2 + $0x18] sm:$0xff]
    %v81 = vld [vmem:[#allocation2 + $0x20] sm:$0xff]
    %v82 = vld [vmem:[#allocation2 + $0x28] sm:$0xff]
    %v83 = vld [vmem:[#allocation2 + $0x30] sm:$0xff]
    %v84 = vld [vmem:[#allocation2 + $0x38] sm:$0xff]
    %v85 = vld [vmem:[#allocation2 + $0x40] sm:$0xff]
    %v86 = vld [vmem:[#allocation2 + $0x48] sm:$0xff]
    %v87 = vld [vmem:[#allocation2 + $0x50] sm:$0xff]
    %v88 = vld [vmem:[#allocation2 + $0x58] sm:$0xff]
    %v89 = vld [vmem:[#allocation2 + $0x60] sm:$0xff]
    %v90 = vld [vmem:[#allocation2 + $0x68] sm:$0xff]
    %v91 = vld [vmem:[#allocation2 + $0x70] sm:$0xff]
    %v92 = vld [vmem:[#allocation2 + $0x78] sm:$0xff]
    %v93 = vld [vmem:[#allocation2 + $0x80] sm:$0xff]
    %v94 = vld [vmem:[#allocation2 + $0x88] sm:$0xff]
    %v95 = vld [vmem:[#allocation2 + $0x90] sm:$0xff]
    %v96 = vld [vmem:[#allocation2 + $0x98] sm:$0xff]
    %v97 = vld [vmem:[#allocation2 + $0xa0] sm:$0xff]
    %v98 = vld [vmem:[#allocation2 + $0xa8] sm:$0xff]
    %v99 = vld [vmem:[#allocation2 + $0xb0] sm:$0xff]
    %v100 = vld [vmem:[#allocation2 + $0xb8] sm:$0xff]
    %v101 = vld [vmem:[#allocation2 + $0xc0] sm:$0xff]
    %v102 = vld [vmem:[#allocation2 + $0xc8] sm:$0xff]
    %v103 = vld [vmem:[#allocation2 + $0xd0] sm:$0xff]
    %v104 = vld [vmem:[#allocation2 + $0xd8] sm:$0xff]
    %v105 = vld [vmem:[#allocation2 + $0xe0] sm:$0xff]
    %v106 = vld [vmem:[#allocation2 + $0xe8] sm:$0xff]
    %v107 = vld [vmem:[#allocation2 + $0xf0] sm:$0xff]
    %v108 = vld [vmem:[#allocation2 + $0xf8] sm:$0xff]
    %v109 = vld [vmem:[#allocation3] sm:$0xff]
    %v110 = vld [vmem:[#allocation3 + $0x8] sm:$0xff]
    %v111 = vld [vmem:[#allocation3 + $0x10] sm:$0xff]
    %v112 = vld [vmem:[#allocation3 + $0x18] sm:$0xff]
    %v113 = vld [vmem:[#allocation3 + $0x20] sm:$0xff]
    %v114 = vld [vmem:[#allocation3 + $0x28] sm:$0xff]
    %v115 = vld [vmem:[#allocation3 + $0x30] sm:$0xff]
    %v116 = vld [vmem:[#allocation3 + $0x38] sm:$0xff]
    %v117 = vld [vmem:[#allocation3 + $0x40] sm:$0xff]
    %v118 = vld [vmem:[#allocation3 + $0x48] sm:$0xff]
    %v119 = vld [vmem:[#allocation3 + $0x50] sm:$0xff]
    %v120 = vld [vmem:[#allocation3 + $0x58] sm:$0xff]
    %v121 = vld [vmem:[#allocation3 + $0x60] sm:$0xff]
    %v122 = vld [vmem:[#allocation3 + $0x68] sm:$0xff]
    %v123 = vld [vmem:[#allocation3 + $0x70] sm:$0xff]
    %v124 = vld [vmem:[#allocation3 + $0x78] sm:$0xff]
    %v125 = vld [vmem:[#allocation3 + $0x80] sm:$0xff]
    %v126 = vld [vmem:[#allocation3 + $0x88] sm:$0xff]
    %v127 = vld [vmem:[#allocation3 + $0x90] sm:$0xff]
    %v128 = vld [vmem:[#allocation3 + $0x98] sm:$0xff]
    %v129 = vld [vmem:[#allocation3 + $0xa0] sm:$0xff]
    %v130 = vld [vmem:[#allocation3 + $0xa8] sm:$0xff]
    %v131 = vld [vmem:[#allocation3 + $0xb0] sm:$0xff]
    %v132 = vld [vmem:[#allocation3 + $0xb8] sm:$0xff]
    %v133 = vld [vmem:[#allocation3 + $0xc0] sm:$0xff]
    %v134 = vld [vmem:[#allocation3 + $0xc8] sm:$0xff]
    %v135 = vld [vmem:[#allocation3 + $0xd0] sm:$0xff]
    %v136 = vld [vmem:[#allocation3 + $0xd8] sm:$0xff]
    %v137 = vld [vmem:[#allocation3 + $0xe0] sm:$0xff]
    %v138 = vld [vmem:[#allocation3 + $0xe8] sm:$0xff]
    %v139 = vld [vmem:[#allocation3 + $0xf0] sm:$0xff]
    %v140 = vld [vmem:[#allocation3 + $0xf8] sm:$0xff]
    %v141 = vld [vmem:[#allocation3 + $0x100] sm:$0xff]
    %v142 = vld [vmem:[#allocation3 + $0x108] sm:$0xff]
    %v143 = vld [vmem:[#allocation3 + $0x110] sm:$0xff]
    %v144 = vld [vmem:[#allocation3 + $0x118] sm:$0xff]
    %v145 = vld [vmem:[#allocation3 + $0x120] sm:$0xff]
    %v146 = vld [vmem:[#allocation3 + $0x128] sm:$0xff]
    %v147 = vld [vmem:[#allocation3 + $0x130] sm:$0xff]
    %v148 = vld [vmem:[#allocation3 + $0x138] sm:$0xff]
    %v149 = vld [vmem:[#allocation3 + $0x140] sm:$0xff]
    %v150 = vld [vmem:[#allocation3 + $0x148] sm:$0xff]
    %v151 = vld [vmem:[#allocation3 + $0x150] sm:$0xff]
    %v152 = vld [vmem:[#allocation3 + $0x158] sm:$0xff]
    %v153 = vld [vmem:[#allocation3 + $0x160] sm:$0xff]
    %v154 = vld [vmem:[#allocation3 + $0x168] sm:$0xff]
    %v155 = vld [vmem:[#allocation3 + $0x170] sm:$0xff]
    %v156 = vld [vmem:[#allocation3 + $0x178] sm:$0xff]
    %v157 = vld [vmem:[#allocation3 + $0x180] sm:$0xff]
    %v158 = vld [vmem:[#allocation3 + $0x188] sm:$0xff]
    %v159 = vld [vmem:[#allocation3 + $0x190] sm:$0xff]
    %v160 = vld [vmem:[#allocation3 + $0x198] sm:$0xff]
    %v161 = vld [vmem:[#allocation3 + $0x1a0] sm:$0xff]
    %v162 = vld [vmem:[#allocation3 + $0x1a8] sm:$0xff]
    %v163 = vld [vmem:[#allocation3 + $0x1b0] sm:$0xff]
    %v164 = vld [vmem:[#allocation3 + $0x1b8] sm:$0xff]
    %v165 = vld [vmem:[#allocation3 + $0x1c0] sm:$0xff]
    %v166 = vld [vmem:[#allocation3 + $0x1c8] sm:$0xff]
    %v167 = vld [vmem:[#allocation3 + $0x1d0] sm:$0xff]
    %v168 = vld [vmem:[#allocation3 + $0x1d8] sm:$0xff]
    %v169 = vld [vmem:[#allocation3 + $0x1e0] sm:$0xff]
    %v170 = vld [vmem:[#allocation3 + $0x1e8] sm:$0xff]
    %v171 = vld [vmem:[#allocation3 + $0x1f0] sm:$0xff]
    %v172 = vld [vmem:[#allocation3 + $0x1f8] sm:$0xff]
    %v173 = vld [vmem:[#allocation6] sm:$0xf]
    %v174 = vld [vmem:[#allocation6 + $0x4] sm:$0xf]
    %v175 = vld [vmem:[#allocation6 + $0x8] sm:$0xf]
    %v176 = vld [vmem:[#allocation6 + $0xc] sm:$0xf]
    %v177 = vld [vmem:[#allocation6 + $0x10] sm:$0xf]
    %v178 = vld [vmem:[#allocation6 + $0x14] sm:$0xf]
    %v179 = vld [vmem:[#allocation6 + $0x18] sm:$0xf]
    %v180 = vld [vmem:[#allocation6 + $0x1c] sm:$0xf]
    %v181 = vld [vmem:[#allocation6 + $0x20] sm:$0xf]
    %v182 = vld [vmem:[#allocation6 + $0x24] sm:$0xf]
    %v183 = vld [vmem:[#allocation6 + $0x28] sm:$0xf]
    %v184 = vld [vmem:[#allocation6 + $0x2c] sm:$0xf]
    %v185 = vld [vmem:[#allocation6 + $0x30] sm:$0xf]
    %v186 = vld [vmem:[#allocation6 + $0x34] sm:$0xf]
    %v187 = vld [vmem:[#allocation6 + $0x38] sm:$0xf]
    %v188 = vld [vmem:[#allocation6 + $0x3c] sm:$0xf]
    %v189 = vld [vmem:[#allocation6 + $0x40] sm:$0xf]
    %v190 = vld [vmem:[#allocation6 + $0x44] sm:$0xf]
    %v191 = vld [vmem:[#allocation6 + $0x48] sm:$0xf]
    %v192 = vld [vmem:[#allocation6 + $0x4c] sm:$0xf]
    %v193 = vld [vmem:[#allocation6 + $0x50] sm:$0xf]
    %v194 = vld [vmem:[#allocation6 + $0x54] sm:$0xf]
    %v195 = vld [vmem:[#allocation6 + $0x58] sm:$0xf]
    %v196 = vld [vmem:[#allocation6 + $0x5c] sm:$0xf]
    %v197 = vld [vmem:[#allocation6 + $0x60] sm:$0xf]
    %v198 = vld [vmem:[#allocation6 + $0x64] sm:$0xf]
    %v199 = vld [vmem:[#allocation6 + $0x68] sm:$0xf]
    %v200 = vld [vmem:[#allocation6 + $0x6c] sm:$0xf]
    %v201 = vld [vmem:[#allocation6 + $0x70] sm:$0xf]
    %v202 = vld [vmem:[#allocation6 + $0x74] sm:$0xf]
    %v203 = vld [vmem:[#allocation6 + $0x78] sm:$0xf]
    %v204 = vld [vmem:[#allocation6 + $0x7c] sm:$0xf]
    %v205 = vld [vmem:[#allocation6 + $0x80] sm:$0xf]
    %v206 = vld [vmem:[#allocation6 + $0x84] sm:$0xf]
    %v207 = vld [vmem:[#allocation6 + $0x88] sm:$0xf]
    %v208 = vld [vmem:[#allocation6 + $0x8c] sm:$0xf]
    %v209 = vld [vmem:[#allocation6 + $0x90] sm:$0xf]
    %v210 = vld [vmem:[#allocation6 + $0x94] sm:$0xf]
    %v211 = vld [vmem:[#allocation6 + $0x98] sm:$0xf]
    %v212 = vld [vmem:[#allocation6 + $0x9c] sm:$0xf]
    %v213 = vld [vmem:[#allocation6 + $0xa0] sm:$0xf]
    %v214 = vld [vmem:[#allocation6 + $0xa4] sm:$0xf]
    %v215 = vld [vmem:[#allocation6 + $0xa8] sm:$0xf]
    %v216 = vld [vmem:[#allocation6 + $0xac] sm:$0xf]
    %v217 = vld [vmem:[#allocation6 + $0xb0] sm:$0xf]
    %v218 = vld [vmem:[#allocation6 + $0xb4] sm:$0xf]
    %v219 = vld [vmem:[#allocation6 + $0xb8] sm:$0xf]
    %v220 = vld [vmem:[#allocation6 + $0xbc] sm:$0xf]
    %v221 = vld [vmem:[#allocation6 + $0xc0] sm:$0xf]
    %v222 = vld [vmem:[#allocation6 + $0xc4] sm:$0xf]
    %v223 = vld [vmem:[#allocation6 + $0xc8] sm:$0xf]
    %v224 = vld [vmem:[#allocation6 + $0xcc] sm:$0xf]
    %v225 = vld [vmem:[#allocation6 + $0xd0] sm:$0xf]
    %v226 = vld [vmem:[#allocation6 + $0xd4] sm:$0xf]
    %v227 = vld [vmem:[#allocation6 + $0xd8] sm:$0xf]
    %v228 = vld [vmem:[#allocation6 + $0xdc] sm:$0xf]
    %v229 = vld [vmem:[#allocation6 + $0xe0] sm:$0xf]
    %v230 = vld [vmem:[#allocation6 + $0xe4] sm:$0xf]
    %v231 = vld [vmem:[#allocation6 + $0xe8] sm:$0xf]
    %v232 = vld [vmem:[#allocation6 + $0xec] sm:$0xf]
    %v233 = vld [vmem:[#allocation6 + $0xf0] sm:$0xf]
    %v234 = vld [vmem:[#allocation6 + $0xf4] sm:$0xf]
    %v235 = vld [vmem:[#allocation6 + $0xf8] sm:$0xf]
    %v236 = vld [vmem:[#allocation6 + $0xfc] sm:$0xf]
    %v301 = vunpack.c.l.b16 %v109
    %v302 = vunpack.c.h.b16 %v109
    %v303 = vunpack.c.l.b16 %v110
    %v304 = vunpack.c.h.b16 %v110
    %v305 = vunpack.c.l.b16 %v111
    %v306 = vunpack.c.h.b16 %v111
    %v307 = vunpack.c.l.b16 %v112
    %v308 = vunpack.c.h.b16 %v112
    %v309 = vunpack.c.l.b16 %v113
    %v310 = vunpack.c.h.b16 %v113
    %v311 = vunpack.c.l.b16 %v114
    %v312 = vunpack.c.h.b16 %v114
    %v313 = vunpack.c.l.b16 %v115
    %v314 = vunpack.c.h.b16 %v115
    %v315 = vunpack.c.l.b16 %v116
    %v316 = vunpack.c.h.b16 %v116
    %v317 = vunpack.c.l.b16 %v117
    %v318 = vunpack.c.h.b16 %v117
    %v319 = vunpack.c.l.b16 %v118
    %v320 = vunpack.c.h.b16 %v118
    %v321 = vunpack.c.l.b16 %v119
    %v322 = vunpack.c.h.b16 %v119
    %v323 = vunpack.c.l.b16 %v120
    %v324 = vunpack.c.h.b16 %v120
    %v325 = vunpack.c.l.b16 %v121
    %v326 = vunpack.c.h.b16 %v121
    %v327 = vunpack.c.l.b16 %v122
    %v328 = vunpack.c.h.b16 %v122
    %v329 = vunpack.c.l.b16 %v123
    %v330 = vunpack.c.h.b16 %v123
    %v331 = vunpack.c.l.b16 %v124
    %v332 = vunpack.c.h.b16 %v124
    %v333 = vunpack.c.l.b16 %v125
    %v334 = vunpack.c.h.b16 %v125
    %v335 = vunpack.c.l.b16 %v126
    %v336 = vunpack.c.h.b16 %v126
    %v337 = vunpack.c.l.b16 %v127
    %v338 = vunpack.c.h.b16 %v127
    %v339 = vunpack.c.l.b16 %v128
    %v340 = vunpack.c.h.b16 %v128
    %v341 = vunpack.c.l.b16 %v129
    %v342 = vunpack.c.h.b16 %v129
    %v343 = vunpack.c.l.b16 %v130
    %v344 = vunpack.c.h.b16 %v130
    %v345 = vunpack.c.l.b16 %v131
    %v346 = vunpack.c.h.b16 %v131
    %v347 = vunpack.c.l.b16 %v132
    %v348 = vunpack.c.h.b16 %v132
    %v349 = vunpack.c.l.b16 %v133
    %v350 = vunpack.c.h.b16 %v133
    %v351 = vunpack.c.l.b16 %v134
    %v352 = vunpack.c.h.b16 %v134
    %v353 = vunpack.c.l.b16 %v135
    %v354 = vunpack.c.h.b16 %v135
    %v355 = vunpack.c.l.b16 %v136
    %v356 = vunpack.c.h.b16 %v136
    %v357 = vunpack.c.l.b16 %v137
    %v358 = vunpack.c.h.b16 %v137
    %v359 = vunpack.c.l.b16 %v138
    %v360 = vunpack.c.h.b16 %v138
    %v361 = vunpack.c.l.b16 %v139
    %v362 = vunpack.c.h.b16 %v139
    %v363 = vunpack.c.l.b16 %v140
    %v364 = vunpack.c.h.b16 %v140
    %v365 = vunpack.c.l.b16 %v141
    %v366 = vunpack.c.h.b16 %v141
    %v367 = vunpack.c.l.b16 %v142
    %v368 = vunpack.c.h.b16 %v142
    %v369 = vunpack.c.l.b16 %v143
    %v370 = vunpack.c.h.b16 %v143
    %v371 = vunpack.c.l.b16 %v144
    %v372 = vunpack.c.h.b16 %v144
    %v373 = vunpack.c.l.b16 %v145
    %v374 = vunpack.c.h.b16 %v145
    %v375 = vunpack.c.l.b16 %v146
    %v376 = vunpack.c.h.b16 %v146
    %v377 = vunpack.c.l.b16 %v147
    %v378 = vunpack.c.h.b16 %v147
    %v379 = vunpack.c.l.b16 %v148
    %v380 = vunpack.c.h.b16 %v148
    %v381 = vunpack.c.l.b16 %v149
    %v382 = vunpack.c.h.b16 %v149
    %v383 = vunpack.c.l.b16 %v150
    %v384 = vunpack.c.h.b16 %v150
    %v385 = vunpack.c.l.b16 %v151
    %v386 = vunpack.c.h.b16 %v151
    %v387 = vunpack.c.l.b16 %v152
    %v388 = vunpack.c.h.b16 %v152
    %v389 = vunpack.c.l.b16 %v153
    %v390 = vunpack.c.h.b16 %v153
    %v391 = vunpack.c.l.b16 %v154
    %v392 = vunpack.c.h.b16 %v154
    %v393 = vunpack.c.l.b16 %v155
    %v394 = vunpack.c.h.b16 %v155
    %v395 = vunpack.c.l.b16 %v156
    %v396 = vunpack.c.h.b16 %v156
    %v397 = vunpack.c.l.b16 %v157
    %v398 = vunpack.c.h.b16 %v157
    %v399 = vunpack.c.l.b16 %v158
    %v400 = vunpack.c.h.b16 %v158
    %v401 = vunpack.c.l.b16 %v159
    %v402 = vunpack.c.h.b16 %v159
    %v403 = vunpack.c.l.b16 %v160
    %v404 = vunpack.c.h.b16 %v160
    %v405 = vunpack.c.l.b16 %v161
    %v406 = vunpack.c.h.b16 %v161
    %v407 = vunpack.c.l.b16 %v162
    %v408 = vunpack.c.h.b16 %v162
    %v409 = vunpack.c.l.b16 %v163
    %v410 = vunpack.c.h.b16 %v163
    %v411 = vunpack.c.l.b16 %v164
    %v412 = vunpack.c.h.b16 %v164
    %v413 = vunpack.c.l.b16 %v165
    %v414 = vunpack.c.h.b16 %v165
    %v415 = vunpack.c.l.b16 %v166
    %v416 = vunpack.c.h.b16 %v166
    %v417 = vunpack.c.l.b16 %v167
    %v418 = vunpack.c.h.b16 %v167
    %v419 = vunpack.c.l.b16 %v168
    %v420 = vunpack.c.h.b16 %v168
    %v421 = vunpack.c.l.b16 %v169
    %v422 = vunpack.c.h.b16 %v169
    %v423 = vunpack.c.l.b16 %v170
    %v424 = vunpack.c.h.b16 %v170
    %v425 = vunpack.c.l.b16 %v171
    %v426 = vunpack.c.h.b16 %v171
    %v427 = vunpack.c.l.b16 %v172
    %v428 = vunpack.c.h.b16 %v172
    %v429 = vpack.c.b16 %v305, %v301
    %v430 = vpack.c.b16 %v306, %v302
    %v431 = vpack.c.b16 %v307, %v303
    %v432 = vpack.c.b16 %v308, %v304
    %v433 = vpack.c.b16 %v313, %v309
    %v434 = vpack.c.b16 %v314, %v310
    %v435 = vpack.c.b16 %v315, %v311
    %v436 = vpack.c.b16 %v316, %v312
    %v437 = vpack.c.b16 %v321, %v317
    %v438 = vpack.c.b16 %v322, %v318
    %v439 = vpack.c.b16 %v323, %v319
    %v440 = vpack.c.b16 %v324, %v320
    %v441 = vpack.c.b16 %v329, %v325
    %v442 = vpack.c.b16 %v330, %v326
    %v443 = vpack.c.b16 %v331, %v327
    %v444 = vpack.c.b16 %v332, %v328
    %v445 = vpack.c.b16 %v337, %v333
    %v446 = vpack.c.b16 %v338, %v334
    %v447 = vpack.c.b16 %v339, %v335
    %v448 = vpack.c.b16 %v340, %v336
    %v449 = vpack.c.b16 %v345, %v341
    %v450 = vpack.c.b16 %v346, %v342
    %v451 = vpack.c.b16 %v347, %v343
    %v452 = vpack.c.b16 %v348, %v344
    %v453 = vpack.c.b16 %v353, %v349
    %v454 = vpack.c.b16 %v354, %v350
    %v455 = vpack.c.b16 %v355, %v351
    %v456 = vpack.c.b16 %v356, %v352
    %v457 = vpack.c.b16 %v361, %v357
    %v458 = vpack.c.b16 %v362, %v358
    %v459 = vpack.c.b16 %v363, %v359
    %v460 = vpack.c.b16 %v364, %v360
    %v461 = vpack.c.b16 %v369, %v365
    %v462 = vpack.c.b16 %v370, %v366
    %v463 = vpack.c.b16 %v371, %v367
    %v464 = vpack.c.b16 %v372, %v368
    %v465 = vpack.c.b16 %v377, %v373
    %v466 = vpack.c.b16 %v378, %v374
    %v467 = vpack.c.b16 %v379, %v375
    %v468 = vpack.c.b16 %v380, %v376
    %v469 = vpack.c.b16 %v385, %v381
    %v470 = vpack.c.b16 %v386, %v382
    %v471 = vpack.c.b16 %v387, %v383
    %v472 = vpack.c.b16 %v388, %v384
    %v473 = vpack.c.b16 %v393, %v389
    %v474 = vpack.c.b16 %v394, %v390
    %v475 = vpack.c.b16 %v395, %v391
    %v476 = vpack.c.b16 %v396, %v392
    %v477 = vpack.c.b16 %v401, %v397
    %v478 = vpack.c.b16 %v402, %v398
    %v479 = vpack.c.b16 %v403, %v399
    %v480 = vpack.c.b16 %v404, %v400
    %v481 = vpack.c.b16 %v409, %v405
    %v482 = vpack.c.b16 %v410, %v406
    %v483 = vpack.c.b16 %v411, %v407
    %v484 = vpack.c.b16 %v412, %v408
    %v485 = vpack.c.b16 %v417, %v413
    %v486 = vpack.c.b16 %v418, %v414
    %v487 = vpack.c.b16 %v419, %v415
    %v488 = vpack.c.b16 %v420, %v416
    %v489 = vpack.c.b16 %v425, %v421
    %v490 = vpack.c.b16 %v426, %v422
    %v491 = vpack.c.b16 %v427, %v423
    %v492 = vpack.c.b16 %v428, %v424
    %v621 = vunpack.c.l.b16 %v173
    %v622 = vunpack.c.l.b16 %v174
    %v623 = vunpack.c.l.b16 %v175
    %v624 = vunpack.c.l.b16 %v176
    %v625 = vunpack.c.l.b16 %v177
    %v626 = vunpack.c.l.b16 %v178
    %v627 = vunpack.c.l.b16 %v179
    %v628 = vunpack.c.l.b16 %v180
    %v629 = vunpack.c.l.b16 %v181
    %v630 = vunpack.c.l.b16 %v182
    %v631 = vunpack.c.l.b16 %v183
    %v632 = vunpack.c.l.b16 %v184
    %v633 = vunpack.c.l.b16 %v185
    %v634 = vunpack.c.l.b16 %v186
    %v635 = vunpack.c.l.b16 %v187
    %v636 = vunpack.c.l.b16 %v188
    %v637 = vunpack.c.l.b16 %v189
    %v638 = vunpack.c.l.b16 %v190
    %v639 = vunpack.c.l.b16 %v191
    %v640 = vunpack.c.l.b16 %v192
    %v641 = vunpack.c.l.b16 %v193
    %v642 = vunpack.c.l.b16 %v194
    %v643 = vunpack.c.l.b16 %v195
    %v644 = vunpack.c.l.b16 %v196
    %v645 = vunpack.c.l.b16 %v197
    %v646 = vunpack.c.l.b16 %v198
    %v647 = vunpack.c.l.b16 %v199
    %v648 = vunpack.c.l.b16 %v200
    %v649 = vunpack.c.l.b16 %v201
    %v650 = vunpack.c.l.b16 %v202
    %v651 = vunpack.c.l.b16 %v203
    %v652 = vunpack.c.l.b16 %v204
    %v653 = vunpack.c.l.b16 %v205
    %v654 = vunpack.c.l.b16 %v206
    %v655 = vunpack.c.l.b16 %v207
    %v656 = vunpack.c.l.b16 %v208
    %v657 = vunpack.c.l.b16 %v209
    %v658 = vunpack.c.l.b16 %v210
    %v659 = vunpack.c.l.b16 %v211
    %v660 = vunpack.c.l.b16 %v212
    %v661 = vunpack.c.l.b16 %v213
    %v662 = vunpack.c.l.b16 %v214
    %v663 = vunpack.c.l.b16 %v215
    %v664 = vunpack.c.l.b16 %v216
    %v665 = vunpack.c.l.b16 %v217
    %v666 = vunpack.c.l.b16 %v218
    %v667 = vunpack.c.l.b16 %v219
    %v668 = vunpack.c.l.b16 %v220
    %v669 = vunpack.c.l.b16 %v221
    %v670 = vunpack.c.l.b16 %v222
    %v671 = vunpack.c.l.b16 %v223
    %v672 = vunpack.c.l.b16 %v224
    %v673 = vunpack.c.l.b16 %v225
    %v674 = vunpack.c.l.b16 %v226
    %v675 = vunpack.c.l.b16 %v227
    %v676 = vunpack.c.l.b16 %v228
    %v677 = vunpack.c.l.b16 %v229
    %v678 = vunpack.c.l.b16 %v230
    %v679 = vunpack.c.l.b16 %v231
    %v680 = vunpack.c.l.b16 %v232
    %v681 = vunpack.c.l.b16 %v233
    %v682 = vunpack.c.l.b16 %v234
    %v683 = vunpack.c.l.b16 %v235
    %v684 = vunpack.c.l.b16 %v236
    %v685 = vpack.c.b16 %v622, %v621
    %v686 = vpack.c.b16 %v624, %v623
    %v687 = vpack.c.b16 %v626, %v625
    %v688 = vpack.c.b16 %v628, %v627
    %v689 = vpack.c.b16 %v630, %v629
    %v690 = vpack.c.b16 %v632, %v631
    %v691 = vpack.c.b16 %v634, %v633
    %v692 = vpack.c.b16 %v636, %v635
    %v693 = vpack.c.b16 %v638, %v637
    %v694 = vpack.c.b16 %v640, %v639
    %v695 = vpack.c.b16 %v642, %v641
    %v696 = vpack.c.b16 %v644, %v643
    %v697 = vpack.c.b16 %v646, %v645
    %v698 = vpack.c.b16 %v648, %v647
    %v699 = vpack.c.b16 %v650, %v649
    %v700 = vpack.c.b16 %v652, %v651
    %v701 = vpack.c.b16 %v654, %v653
    %v702 = vpack.c.b16 %v656, %v655
    %v703 = vpack.c.b16 %v658, %v657
    %v704 = vpack.c.b16 %v660, %v659
    %v705 = vpack.c.b16 %v662, %v661
    %v706 = vpack.c.b16 %v664, %v663
    %v707 = vpack.c.b16 %v666, %v665
    %v708 = vpack.c.b16 %v668, %v667
    %v709 = vpack.c.b16 %v670, %v669
    %v710 = vpack.c.b16 %v672, %v671
    %v711 = vpack.c.b16 %v674, %v673
    %v712 = vpack.c.b16 %v676, %v675
    %v713 = vpack.c.b16 %v678, %v677
    %v714 = vpack.c.b16 %v680, %v679
    %v715 = vpack.c.b16 %v682, %v681
    %v716 = vpack.c.b16 %v684, %v683
    %749 = vmatprep.subr.bf16.mxu0 0
    %750 = vmatpush1.bf16.msra.mxu0 %v685
    %751 = vmatprep.subr.bf16.mxu0 0
    %752 = vmatpush1.bf16.msra.mxu0 %v686
    %753 = vmatprep.subr.bf16.mxu0 0
    %754 = vmatpush1.bf16.msra.mxu0 %v687
    %755 = vmatprep.subr.bf16.mxu0 0
    %756 = vmatpush1.bf16.msra.mxu0 %v688
    %757 = vmatprep.subr.bf16.mxu0 0
    %758 = vmatpush1.bf16.msra.mxu0 %v689
    %759 = vmatprep.subr.bf16.mxu0 0
    %760 = vmatpush1.bf16.msra.mxu0 %v690
    %761 = vmatprep.subr.bf16.mxu0 0
    %762 = vmatpush1.bf16.msra.mxu0 %v691
    %763 = vmatprep.subr.bf16.mxu0 0
    %764 = vmatpush1.bf16.msra.mxu0 %v692
    %765 = vmatprep.subr.bf16.mxu0 0
    %766 = vmatpush1.bf16.msra.mxu0 %v693
    %767 = vmatprep.subr.bf16.mxu0 0
    %768 = vmatpush1.bf16.msra.mxu0 %v694
    %769 = vmatprep.subr.bf16.mxu0 0
    %770 = vmatpush1.bf16.msra.mxu0 %v695
    %771 = vmatprep.subr.bf16.mxu0 0
    %772 = vmatpush1.bf16.msra.mxu0 %v696
    %773 = vmatprep.subr.bf16.mxu0 0
    %774 = vmatpush1.bf16.msra.mxu0 %v697
    %775 = vmatprep.subr.bf16.mxu0 0
    %776 = vmatpush1.bf16.msra.mxu0 %v698
    %777 = vmatprep.subr.bf16.mxu0 0
    %778 = vmatpush1.bf16.msra.mxu0 %v699
    %779 = vmatprep.subr.bf16.mxu0 0
    %780 = vmatpush1.bf16.msra.mxu0 %v700
    %781 = vmatprep.mubr.bf16.mxu0 %v430
    %782 = vmatmul.mubr.bf16.gmra.mrb[0].mxu0 %v429
    %v783 = vpop.f32.mrb[0].mxu0
    %v784 = vadd.f32 0.0, %v783
    %v785 = vpop.f32.mrb[0].mxu0
    %v786 = vpop.f32.mrb[0].mxu0
    %v787 = vadd.f32 0.0, %v786
    %v788 = vpop.f32.mrb[0].mxu0
    %789 = vmatprep.mubr.bf16.mxu0 %v434
    %790 = vmatmul.mubr.bf16.gmra.mrb[0].mxu0 %v433
    %v791 = vpop.f32.mrb[0].mxu0
    %v792 = vadd.f32 0.0, %v791
    %v793 = vpop.f32.mrb[0].mxu0
    %v794 = vpop.f32.mrb[0].mxu0
    %v795 = vadd.f32 0.0, %v794
    %v796 = vpop.f32.mrb[0].mxu0
    %797 = vmatprep.mubr.bf16.mxu0 %v438
    %798 = vmatmul.mubr.bf16.gmra.mrb[0].mxu0 %v437
    %v799 = vpop.f32.mrb[0].mxu0
    %v800 = vadd.f32 0.0, %v799
    %v801 = vpop.f32.mrb[0].mxu0
    %v802 = vpop.f32.mrb[0].mxu0
    %v803 = vadd.f32 0.0, %v802
    %v804 = vpop.f32.mrb[0].mxu0
    %805 = vmatprep.mubr.bf16.mxu0 %v442
    %806 = vmatmul.mubr.bf16.gmra.mrb[0].mxu0 %v441
    %v807 = vpop.f32.mrb[0].mxu0
    %v808 = vadd.f32 0.0, %v807
    %v809 = vpop.f32.mrb[0].mxu0
    %v810 = vpop.f32.mrb[0].mxu0
    %v811 = vadd.f32 0.0, %v810
    %v812 = vpop.f32.mrb[0].mxu0
    %813 = vmatprep.mubr.bf16.mxu0 %v446
    %814 = vmatmul.mubr.bf16.gmra.mrb[0].mxu0 %v445
    %v815 = vpop.f32.mrb[0].mxu0
    %v816 = vadd.f32 0.0, %v815
    %v817 = vpop.f32.mrb[0].mxu0
    %v818 = vpop.f32.mrb[0].mxu0
    %v819 = vadd.f32 0.0, %v818
    %v820 = vpop.f32.mrb[0].mxu0
    %821 = vmatprep.mubr.bf16.mxu0 %v450
    %822 = vmatmul.mubr.bf16.gmra.mrb[0].mxu0 %v449
    %v823 = vpop.f32.mrb[0].mxu0
    %v824 = vadd.f32 0.0, %v823
    %v825 = vpop.f32.mrb[0].mxu0
    %v826 = vpop.f32.mrb[0].mxu0
    %v827 = vadd.f32 0.0, %v826
    %v828 = vpop.f32.mrb[0].mxu0
    %829 = vmatprep.mubr.bf16.mxu0 %v454
    %830 = vmatmul.mubr.bf16.gmra.mrb[0].mxu0 %v453
    %v831 = vpop.f32.mrb[0].mxu0
    %v832 = vadd.f32 0.0, %v831
    %v833 = vpop.f32.mrb[0].mxu0
    %v834 = vpop.f32.mrb[0].mxu0
    %v835 = vadd.f32 0.0, %v834
    %v836 = vpop.f32.mrb[0].mxu0
    %837 = vmatprep.mubr.bf16.mxu0 %v458
    %838 = vmatmul.mubr.bf16.gmra.mrb[0].mxu0 %v457
    %v839 = vpop.f32.mrb[0].mxu0
    %v840 = vadd.f32 0.0, %v839
    %v841 = vpop.f32.mrb[0].mxu0
    %v842 = vpop.f32.mrb[0].mxu0
    %v843 = vadd.f32 0.0, %v842
    %v844 = vpop.f32.mrb[0].mxu0
    %845 = vmatprep.mubr.bf16.mxu0 %v462
    %846 = vmatmul.mubr.bf16.gmra.mrb[0].mxu0 %v461
    %v847 = vpop.f32.mrb[0].mxu0
    %v848 = vadd.f32 0.0, %v847
    %v849 = vpop.f32.mrb[0].mxu0
    %v850 = vpop.f32.mrb[0].mxu0
    %v851 = vadd.f32 0.0, %v850
    %v852 = vpop.f32.mrb[0].mxu0
    %853 = vmatprep.mubr.bf16.mxu0 %v466
    %854 = vmatmul.mubr.bf16.gmra.mrb[0].mxu0 %v465
    %v855 = vpop.f32.mrb[0].mxu0
    %v856 = vadd.f32 0.0, %v855
    %v857 = vpop.f32.mrb[0].mxu0
    %v858 = vpop.f32.mrb[0].mxu0
    %v859 = vadd.f32 0.0, %v858
    %v860 = vpop.f32.mrb[0].mxu0
    %861 = vmatprep.mubr.bf16.mxu0 %v470
    %862 = vmatmul.mubr.bf16.gmra.mrb[0].mxu0 %v469
    %v863 = vpop.f32.mrb[0].mxu0
    %v864 = vadd.f32 0.0, %v863
    %v865 = vpop.f32.mrb[0].mxu0
    %v866 = vpop.f32.mrb[0].mxu0
    %v867 = vadd.f32 0.0, %v866
    %v868 = vpop.f32.mrb[0].mxu0
    %869 = vmatprep.mubr.bf16.mxu0 %v474
    %870 = vmatmul.mubr.bf16.gmra.mrb[0].mxu0 %v473
    %v871 = vpop.f32.mrb[0].mxu0
    %v872 = vadd.f32 0.0, %v871
    %v873 = vpop.f32.mrb[0].mxu0
    %v874 = vpop.f32.mrb[0].mxu0
    %v875 = vadd.f32 0.0, %v874
    %v876 = vpop.f32.mrb[0].mxu0
    %877 = vmatprep.mubr.bf16.mxu0 %v478
    %878 = vmatmul.mubr.bf16.gmra.mrb[0].mxu0 %v477
    %v879 = vpop.f32.mrb[0].mxu0
    %v880 = vadd.f32 0.0, %v879
    %v881 = vpop.f32.mrb[0].mxu0
    %v882 = vpop.f32.mrb[0].mxu0
    %v883 = vadd.f32 0.0, %v882
    %v884 = vpop.f32.mrb[0].mxu0
    %885 = vmatprep.mubr.bf16.mxu0 %v482
    %886 = vmatmul.mubr.bf16.gmra.mrb[0].mxu0 %v481
    %v887 = vpop.f32.mrb[0].mxu0
    %v888 = vadd.f32 0.0, %v887
    %v889 = vpop.f32.mrb[0].mxu0
    %v890 = vpop.f32.mrb[0].mxu0
    %v891 = vadd.f32 0.0, %v890
    %v892 = vpop.f32.mrb[0].mxu0
    %893 = vmatprep.mubr.bf16.mxu0 %v486
    %894 = vmatmul.mubr.bf16.gmra.mrb[0].mxu0 %v485
    %v895 = vpop.f32.mrb[0].mxu0
    %v896 = vadd.f32 0.0, %v895
    %v897 = vpop.f32.mrb[0].mxu0
    %v898 = vpop.f32.mrb[0].mxu0
    %v899 = vadd.f32 0.0, %v898
    %v900 = vpop.f32.mrb[0].mxu0
    %901 = vmatprep.mubr.bf16.mxu0 %v490
    %902 = vmatmul.mubr.bf16.gmra.mrb[0].mxu0 %v489
    %v903 = vpop.f32.mrb[0].mxu0
    %v904 = vadd.f32 0.0, %v903
    %v905 = vpop.f32.mrb[0].mxu0
    %v906 = vpop.f32.mrb[0].mxu0
    %v907 = vadd.f32 0.0, %v906
    %v908 = vpop.f32.mrb[0].mxu0
    %909 = vdwg.mxu0
    %910 = vmatprep.subr.bf16.mxu0 0
    %911 = vmatpush1.bf16.msra.mxu0 %v701
    %912 = vmatprep.subr.bf16.mxu0 0
    %913 = vmatpush1.bf16.msra.mxu0 %v702
    %914 = vmatprep.subr.bf16.mxu0 0
    %915 = vmatpush1.bf16.msra.mxu0 %v703
    %916 = vmatprep.subr.bf16.mxu0 0
    %917 = vmatpush1.bf16.msra.mxu0 %v704
    %918 = vmatprep.subr.bf16.mxu0 0
    %919 = vmatpush1.bf16.msra.mxu0 %v705
    %920 = vmatprep.subr.bf16.mxu0 0
    %921 = vmatpush1.bf16.msra.mxu0 %v706
    %922 = vmatprep.subr.bf16.mxu0 0
    %923 = vmatpush1.bf16.msra.mxu0 %v707
    %924 = vmatprep.subr.bf16.mxu0 0
    %925 = vmatpush1.bf16.msra.mxu0 %v708
    %926 = vmatprep.subr.bf16.mxu0 0
    %927 = vmatpush1.bf16.msra.mxu0 %v709
    %928 = vmatprep.subr.bf16.mxu0 0
    %929 = vmatpush1.bf16.msra.mxu0 %v710
    %930 = vmatprep.subr.bf16.mxu0 0
    %931 = vmatpush1.bf16.msra.mxu0 %v711
    %932 = vmatprep.subr.bf16.mxu0 0
    %933 = vmatpush1.bf16.msra.mxu0 %v712
    %934 = vmatprep.subr.bf16.mxu0 0
    %935 = vmatpush1.bf16.msra.mxu0 %v713
    %936 = vmatprep.subr.bf16.mxu0 0
    %937 = vmatpush1.bf16.msra.mxu0 %v714
    %938 = vmatprep.subr.bf16.mxu0 0
    %939 = vmatpush1.bf16.msra.mxu0 %v715
    %940 = vmatprep.subr.bf16.mxu0 0
    %941 = vmatpush1.bf16.msra.mxu0 %v716
    %942 = vmatprep.mubr.bf16.mxu0 %v432
    %943 = vmatmul.mubr.bf16.gmra.mrb[0].mxu0 %v431
    %v944 = vpop.f32.mrb[0].mxu0
    %v945 = vadd.f32 %v784, %v944
    %v946 = vpop.f32.mrb[0].mxu0
    %v947 = vpop.f32.mrb[0].mxu0
    %v948 = vadd.f32 %v787, %v947
    %v949 = vpop.f32.mrb[0].mxu0
    %950 = vmatprep.mubr.bf16.mxu0 %v436
    %951 = vmatmul.mubr.bf16.gmra.mrb[0].mxu0 %v435
    %v952 = vpop.f32.mrb[0].mxu0
    %v953 = vadd.f32 %v792, %v952
    %v954 = vpop.f32.mrb[0].mxu0
    %v955 = vpop.f32.mrb[0].mxu0
    %v956 = vadd.f32 %v795, %v955
    %v957 = vpop.f32.mrb[0].mxu0
    %958 = vmatprep.mubr.bf16.mxu0 %v440
    %959 = vmatmul.mubr.bf16.gmra.mrb[0].mxu0 %v439
    %v960 = vpop.f32.mrb[0].mxu0
    %v961 = vadd.f32 %v800, %v960
    %v962 = vpop.f32.mrb[0].mxu0
    %v963 = vpop.f32.mrb[0].mxu0
    %v964 = vadd.f32 %v803, %v963
    %v965 = vpop.f32.mrb[0].mxu0
    %966 = vmatprep.mubr.bf16.mxu0 %v444
    %967 = vmatmul.mubr.bf16.gmra.mrb[0].mxu0 %v443
    %v968 = vpop.f32.mrb[0].mxu0
    %v969 = vadd.f32 %v808, %v968
    %v970 = vpop.f32.mrb[0].mxu0
    %v971 = vpop.f32.mrb[0].mxu0
    %v972 = vadd.f32 %v811, %v971
    %v973 = vpop.f32.mrb[0].mxu0
    %974 = vmatprep.mubr.bf16.mxu0 %v448
    %975 = vmatmul.mubr.bf16.gmra.mrb[0].mxu0 %v447
    %v976 = vpop.f32.mrb[0].mxu0
    %v977 = vadd.f32 %v816, %v976
    %v978 = vpop.f32.mrb[0].mxu0
    %v979 = vpop.f32.mrb[0].mxu0
    %v980 = vadd.f32 %v819, %v979
    %v981 = vpop.f32.mrb[0].mxu0
    %982 = vmatprep.mubr.bf16.mxu0 %v452
    %983 = vmatmul.mubr.bf16.gmra.mrb[0].mxu0 %v451
    %v984 = vpop.f32.mrb[0].mxu0
    %v985 = vadd.f32 %v824, %v984
    %v986 = vpop.f32.mrb[0].mxu0
    %v987 = vpop.f32.mrb[0].mxu0
    %v988 = vadd.f32 %v827, %v987
    %v989 = vpop.f32.mrb[0].mxu0
    %990 = vmatprep.mubr.bf16.mxu0 %v456
    %991 = vmatmul.mubr.bf16.gmra.mrb[0].mxu0 %v455
    %v992 = vpop.f32.mrb[0].mxu0
    %v993 = vadd.f32 %v832, %v992
    %v994 = vpop.f32.mrb[0].mxu0
    %v995 = vpop.f32.mrb[0].mxu0
    %v996 = vadd.f32 %v835, %v995
    %v997 = vpop.f32.mrb[0].mxu0
    %998 = vmatprep.mubr.bf16.mxu0 %v460
    %999 = vmatmul.mubr.bf16.gmra.mrb[0].mxu0 %v459
    %v1000 = vpop.f32.mrb[0].mxu0
    %v1001 = vadd.f32 %v840, %v1000
    %v1002 = vpop.f32.mrb[0].mxu0
    %v1003 = vpop.f32.mrb[0].mxu0
    %v1004 = vadd.f32 %v843, %v1003
    %v1005 = vpop.f32.mrb[0].mxu0
    %1006 = vmatprep.mubr.bf16.mxu0 %v464
    %1007 = vmatmul.mubr.bf16.gmra.mrb[0].mxu0 %v463
    %v1008 = vpop.f32.mrb[0].mxu0
    %v1009 = vadd.f32 %v848, %v1008
    %v1010 = vpop.f32.mrb[0].mxu0
    %v1011 = vpop.f32.mrb[0].mxu0
    %v1012 = vadd.f32 %v851, %v1011
    %v1013 = vpop.f32.mrb[0].mxu0
    %1014 = vmatprep.mubr.bf16.mxu0 %v468
    %1015 = vmatmul.mubr.bf16.gmra.mrb[0].mxu0 %v467
    %v1016 = vpop.f32.mrb[0].mxu0
    %v1017 = vadd.f32 %v856, %v1016
    %v1018 = vpop.f32.mrb[0].mxu0
    %v1019 = vpop.f32.mrb[0].mxu0
    %v1020 = vadd.f32 %v859, %v1019
    %v1021 = vpop.f32.mrb[0].mxu0
    %1022 = vmatprep.mubr.bf16.mxu0 %v472
    %1023 = vmatmul.mubr.bf16.gmra.mrb[0].mxu0 %v471
    %v1024 = vpop.f32.mrb[0].mxu0
    %v1025 = vadd.f32 %v864, %v1024
    %v1026 = vpop.f32.mrb[0].mxu0
    %v1027 = vpop.f32.mrb[0].mxu0
    %v1028 = vadd.f32 %v867, %v1027
    %v1029 = vpop.f32.mrb[0].mxu0
    %1030 = vmatprep.mubr.bf16.mxu0 %v476
    %1031 = vmatmul.mubr.bf16.gmra.mrb[0].mxu0 %v475
    %v1032 = vpop.f32.mrb[0].mxu0
    %v1033 = vadd.f32 %v872, %v1032
    %v1034 = vpop.f32.mrb[0].mxu0
    %v1035 = vpop.f32.mrb[0].mxu0
    %v1036 = vadd.f32 %v875, %v1035
    %v1037 = vpop.f32.mrb[0].mxu0
    %1038 = vmatprep.mubr.bf16.mxu0 %v480
    %1039 = vmatmul.mubr.bf16.gmra.mrb[0].mxu0 %v479
    %v1040 = vpop.f32.mrb[0].mxu0
    %v1041 = vadd.f32 %v880, %v1040
    %v1042 = vpop.f32.mrb[0].mxu0
    %v1043 = vpop.f32.mrb[0].mxu0
    %v1044 = vadd.f32 %v883, %v1043
    %v1045 = vpop.f32.mrb[0].mxu0
    %1046 = vmatprep.mubr.bf16.mxu0 %v484
    %1047 = vmatmul.mubr.bf16.gmra.mrb[0].mxu0 %v483
    %v1048 = vpop.f32.mrb[0].mxu0
    %v1049 = vadd.f32 %v888, %v1048
    %v1050 = vpop.f32.mrb[0].mxu0
    %v1051 = vpop.f32.mrb[0].mxu0
    %v1052 = vadd.f32 %v891, %v1051
    %v1053 = vpop.f32.mrb[0].mxu0
    %1054 = vmatprep.mubr.bf16.mxu0 %v488
    %1055 = vmatmul.mubr.bf16.gmra.mrb[0].mxu0 %v487
    %v1056 = vpop.f32.mrb[0].mxu0
    %v1057 = vadd.f32 %v896, %v1056
    %v1058 = vpop.f32.mrb[0].mxu0
    %v1059 = vpop.f32.mrb[0].mxu0
    %v1060 = vadd.f32 %v899, %v1059
    %v1061 = vpop.f32.mrb[0].mxu0
    %1062 = vmatprep.mubr.bf16.mxu0 %v492
    %1063 = vmatmul.mubr.bf16.gmra.mrb[0].mxu0 %v491
    %v1064 = vpop.f32.mrb[0].mxu0
    %v1065 = vadd.f32 %v904, %v1064
    %v1066 = vpop.f32.mrb[0].mxu0
    %v1067 = vpop.f32.mrb[0].mxu0
    %v1068 = vadd.f32 %v907, %v1067
    %v1069 = vpop.f32.mrb[0].mxu0
    %1070 = vdwg.mxu0
    %v1071 = vadd.f32 %v77, %v945
    %v1072 = vadd.f32 %v78, %v948
    %v1073 = vadd.f32 %v79, %v953
    %v1074 = vadd.f32 %v80, %v956
    %v1075 = vadd.f32 %v81, %v961
    %v1076 = vadd.f32 %v82, %v964
    %v1077 = vadd.f32 %v83, %v969
    %v1078 = vadd.f32 %v84, %v972
    %v1079 = vadd.f32 %v85, %v977
    %v1080 = vadd.f32 %v86, %v980
    %v1081 = vadd.f32 %v87, %v985
    %v1082 = vadd.f32 %v88, %v988
    %v1083 = vadd.f32 %v89, %v993
    %v1084 = vadd.f32 %v90, %v996
    %v1085 = vadd.f32 %v91, %v1001
    %v1086 = vadd.f32 %v92, %v1004
    %v1087 = vadd.f32 %v93, %v1009
    %v1088 = vadd.f32 %v94, %v1012
    %v1089 = vadd.f32 %v95, %v1017
    %v1090 = vadd.f32 %v96, %v1020
    %v1091 = vadd.f32 %v97, %v1025
    %v1092 = vadd.f32 %v98, %v1028
    %v1093 = vadd.f32 %v99, %v1033
    %v1094 = vadd.f32 %v100, %v1036
    %v1095 = vadd.f32 %v101, %v1041
    %v1096 = vadd.f32 %v102, %v1044
    %v1097 = vadd.f32 %v103, %v1049
    %v1098 = vadd.f32 %v104, %v1052
    %v1099 = vadd.f32 %v105, %v1057
    %v1100 = vadd.f32 %v106, %v1060
    %v1101 = vadd.f32 %v107, %v1065
    %v1102 = vadd.f32 %v108, %v1068
    %1103 = vst [vmem:[#allocation2] sm:$0xff] %v1071
    %1104 = vst [vmem:[#allocation2 + $0x8] sm:$0xff] %v1072
    %1105 = vst [vmem:[#allocation2 + $0x10] sm:$0xff] %v1073
    %1106 = vst [vmem:[#allocation2 + $0x18] sm:$0xff] %v1074
    %1107 = vst [vmem:[#allocation2 + $0x20] sm:$0xff] %v1075
    %1108 = vst [vmem:[#allocation2 + $0x28] sm:$0xff] %v1076
    %1109 = vst [vmem:[#allocation2 + $0x30] sm:$0xff] %v1077
    %1110 = vst [vmem:[#allocation2 + $0x38] sm:$0xff] %v1078
    %1111 = vst [vmem:[#allocation2 + $0x40] sm:$0xff] %v1079
    %1112 = vst [vmem:[#allocation2 + $0x48] sm:$0xff] %v1080
    %1113 = vst [vmem:[#allocation2 + $0x50] sm:$0xff] %v1081
    %1114 = vst [vmem:[#allocation2 + $0x58] sm:$0xff] %v1082
    %1115 = vst [vmem:[#allocation2 + $0x60] sm:$0xff] %v1083
    %1116 = vst [vmem:[#allocation2 + $0x68] sm:$0xff] %v1084
    %1117 = vst [vmem:[#allocation2 + $0x70] sm:$0xff] %v1085
    %1118 = vst [vmem:[#allocation2 + $0x78] sm:$0xff] %v1086
    %1119 = vst [vmem:[#allocation2 + $0x80] sm:$0xff] %v1087
    %1120 = vst [vmem:[#allocation2 + $0x88] sm:$0xff] %v1088
    %1121 = vst [vmem:[#allocation2 + $0x90] sm:$0xff] %v1089
    %1122 = vst [vmem:[#allocation2 + $0x98] sm:$0xff] %v1090
    %1123 = vst [vmem:[#allocation2 + $0xa0] sm:$0xff] %v1091
    %1124 = vst [vmem:[#allocation2 + $0xa8] sm:$0xff] %v1092
    %1125 = vst [vmem:[#allocation2 + $0xb0] sm:$0xff] %v1093
    %1126 = vst [vmem:[#allocation2 + $0xb8] sm:$0xff] %v1094
    %1127 = vst [vmem:[#allocation2 + $0xc0] sm:$0xff] %v1095
    %1128 = vst [vmem:[#allocation2 + $0xc8] sm:$0xff] %v1096
    %1129 = vst [vmem:[#allocation2 + $0xd0] sm:$0xff] %v1097
    %1130 = vst [vmem:[#allocation2 + $0xd8] sm:$0xff] %v1098
    %1131 = vst [vmem:[#allocation2 + $0xe0] sm:$0xff] %v1099
    %1132 = vst [vmem:[#allocation2 + $0xe8] sm:$0xff] %v1100
    %1133 = vst [vmem:[#allocation2 + $0xf0] sm:$0xff] %v1101
    %1134 = vst [vmem:[#allocation2 + $0xf8] sm:$0xff] %v1102
    // Predicated region
    $region22: #{tpu_custom_call.1} parent=1 // pred_check
      %p1135 = pneg %p41
    $region23: #{tpu_custom_call.1} parent=1 // pred_check_branch
      %1137 = sbr.rel (%p1135) target = $region25
    $region24: #{tpu_custom_call.1} parent=1 // pred_region
      %v1138 = vld [vmem:[#allocation2] sm:$0xff]
      %v1139 = vld [vmem:[#allocation2 + $0x8] sm:$0xff]
      %v1140 = vld [vmem:[#allocation2 + $0x10] sm:$0xff]
      %v1141 = vld [vmem:[#allocation2 + $0x18] sm:$0xff]
      %v1142 = vld [vmem:[#allocation2 + $0x20] sm:$0xff]
      %v1143 = vld [vmem:[#allocation2 + $0x28] sm:$0xff]
      %v1144 = vld [vmem:[#allocation2 + $0x30] sm:$0xff]
      %v1145 = vld [vmem:[#allocation2 + $0x38] sm:$0xff]
      %v1146 = vld [vmem:[#allocation2 + $0x40] sm:$0xff]
      %v1147 = vld [vmem:[#allocation2 + $0x48] sm:$0xff]
      %v1148 = vld [vmem:[#allocation2 + $0x50] sm:$0xff]
      %v1149 = vld [vmem:[#allocation2 + $0x58] sm:$0xff]
      %v1150 = vld [vmem:[#allocation2 + $0x60] sm:$0xff]
      %v1151 = vld [vmem:[#allocation2 + $0x68] sm:$0xff]
      %v1152 = vld [vmem:[#allocation2 + $0x70] sm:$0xff]
      %v1153 = vld [vmem:[#allocation2 + $0x78] sm:$0xff]
      %v1154 = vld [vmem:[#allocation2 + $0x80] sm:$0xff]
      %v1155 = vld [vmem:[#allocation2 + $0x88] sm:$0xff]
      %v1156 = vld [vmem:[#allocation2 + $0x90] sm:$0xff]
      %v1157 = vld [vmem:[#allocation2 + $0x98] sm:$0xff]
      %v1158 = vld [vmem:[#allocation2 + $0xa0] sm:$0xff]
      %v1159 = vld [vmem:[#allocation2 + $0xa8] sm:$0xff]
      %v1160 = vld [vmem:[#allocation2 + $0xb0] sm:$0xff]
      %v1161 = vld [vmem:[#allocation2 + $0xb8] sm:$0xff]
      %v1162 = vld [vmem:[#allocation2 + $0xc0] sm:$0xff]
      %v1163 = vld [vmem:[#allocation2 + $0xc8] sm:$0xff]
      %v1164 = vld [vmem:[#allocation2 + $0xd0] sm:$0xff]
      %v1165 = vld [vmem:[#allocation2 + $0xd8] sm:$0xff]
      %v1166 = vld [vmem:[#allocation2 + $0xe0] sm:$0xff]
      %v1167 = vld [vmem:[#allocation2 + $0xe8] sm:$0xff]
      %v1168 = vld [vmem:[#allocation2 + $0xf0] sm:$0xff]
      %v1169 = vld [vmem:[#allocation2 + $0xf8] sm:$0xff]
      %v1170 = vmul.f32 %v1138, %v1154
      %v1171 = vmul.f32 %v1139, %v1155
      %v1172 = vmul.f32 %v1140, %v1156
      %v1173 = vmul.f32 %v1141, %v1157
      %v1174 = vmul.f32 %v1142, %v1158
      %v1175 = vmul.f32 %v1143, %v1159
      %v1176 = vmul.f32 %v1144, %v1160
      %v1177 = vmul.f32 %v1145, %v1161
      %v1178 = vmul.f32 %v1146, %v1162
      %v1179 = vmul.f32 %v1147, %v1163
      %v1180 = vmul.f32 %v1148, %v1164
      %v1181 = vmul.f32 %v1149, %v1165
      %v1182 = vmul.f32 %v1150, %v1166
      %v1183 = vmul.f32 %v1151, %v1167
      %v1184 = vmul.f32 %v1152, %v1168
      %v1185 = vmul.f32 %v1153, %v1169
      %1186 = vadd.xlane.f32.xlu0 %v1170
      %v1187 = vpop.xlane.xlu0 %1186
      %1188 = vadd.xlane.f32.xlu0 %v1171
      %v1189 = vpop.xlane.xlu0 %1188
      %1190 = vadd.xlane.f32.xlu0 %v1172
      %v1191 = vpop.xlane.xlu0 %1190
      %1192 = vadd.xlane.f32.xlu0 %v1173
      %v1193 = vpop.xlane.xlu0 %1192
      %1194 = vadd.xlane.f32.xlu0 %v1174
      %v1195 = vpop.xlane.xlu0 %1194
      %1196 = vadd.xlane.f32.xlu0 %v1175
      %v1197 = vpop.xlane.xlu0 %1196
      %1198 = vadd.xlane.f32.xlu0 %v1176
      %v1199 = vpop.xlane.xlu0 %1198
      %1200 = vadd.xlane.f32.xlu0 %v1177
      %v1201 = vpop.xlane.xlu0 %1200
      %1202 = vadd.xlane.f32.xlu0 %v1178
      %v1203 = vpop.xlane.xlu0 %1202
      %1204 = vadd.xlane.f32.xlu0 %v1179
      %v1205 = vpop.xlane.xlu0 %1204
      %1206 = vadd.xlane.f32.xlu0 %v1180
      %v1207 = vpop.xlane.xlu0 %1206
      %1208 = vadd.xlane.f32.xlu0 %v1181
      %v1209 = vpop.xlane.xlu0 %1208
      %1210 = vadd.xlane.f32.xlu0 %v1182
      %v1211 = vpop.xlane.xlu0 %1210
      %1212 = vadd.xlane.f32.xlu0 %v1183
      %v1213 = vpop.xlane.xlu0 %1212
      %1214 = vadd.xlane.f32.xlu0 %v1184
      %v1215 = vpop.xlane.xlu0 %1214
      %1216 = vadd.xlane.f32.xlu0 %v1185
      %v1217 = vpop.xlane.xlu0 %1216
      %v1234 = vlaneseq
      %v1235 = vand.u32 %v1234, 127
      %v1236 = vlaneseq
      %v1237 = vshrl.u32 %v1236, 7
      %v1238 = vsub.s32 %v1235, %v1237
      %v1239 = vrot.slane %v1187, %v1238
      %v1240 = vadd.s32 %v1235, 4294967288
      %v1241 = vlaneseq
      %v1242 = vshrl.u32 %v1241, 7
      %v1243 = vsub.s32 %v1240, %v1242
      %v1244 = vrot.slane %v1189, %v1243
      %vm1245 = vcmask 130112
      %v1246 = vsel %vm1245, %v1244, %v1239
      %v1247 = vadd.s32 %v1235, 4294967280
      %v1248 = vlaneseq
      %v1249 = vshrl.u32 %v1248, 7
      %v1250 = vsub.s32 %v1247, %v1249
      %v1251 = vrot.slane %v1191, %v1250
      %vm1252 = vcmask 195712
      %v1253 = vsel %vm1252, %v1251, %v1246
      %v1254 = vadd.s32 %v1235, 4294967272
      %v1255 = vlaneseq
      %v1256 = vshrl.u32 %v1255, 7
      %v1257 = vsub.s32 %v1254, %v1256
      %v1258 = vrot.slane %v1193, %v1257
      %vm1259 = vcmask 261312
      %v1260 = vsel %vm1259, %v1258, %v1253
      %v1261 = vadd.s32 %v1235, 4294967264
      %v1262 = vlaneseq
      %v1263 = vshrl.u32 %v1262, 7
      %v1264 = vsub.s32 %v1261, %v1263
      %v1265 = vrot.slane %v1195, %v1264
      %vm1266 = vcmask 326912
      %v1267 = vsel %vm1266, %v1265, %v1260
      %v1268 = vadd.s32 %v1235, 4294967256
      %v1269 = vlaneseq
      %v1270 = vshrl.u32 %v1269, 7
      %v1271 = vsub.s32 %v1268, %v1270
      %v1272 = vrot.slane %v1197, %v1271
      %vm1273 = vcmask 392512
      %v1274 = vsel %vm1273, %v1272, %v1267
      %v1275 = vadd.s32 %v1235, 4294967248
      %v1276 = vlaneseq
      %v1277 = vshrl.u32 %v1276, 7
      %v1278 = vsub.s32 %v1275, %v1277
      %v1279 = vrot.slane %v1199, %v1278
      %vm1280 = vcmask 458112
      %v1281 = vsel %vm1280, %v1279, %v1274
      %v1282 = vadd.s32 %v1235, 4294967240
      %v1283 = vlaneseq
      %v1284 = vshrl.u32 %v1283, 7
      %v1285 = vsub.s32 %v1282, %v1284
      %v1286 = vrot.slane %v1201, %v1285
      %vm1287 = vcmask 523712
      %v1288 = vsel %vm1287, %v1286, %v1281
      %v1289 = vadd.s32 %v1235, 4294967232
      %v1290 = vlaneseq
      %v1291 = vshrl.u32 %v1290, 7
      %v1292 = vsub.s32 %v1289, %v1291
      %v1293 = vrot.slane %v1203, %v1292
      %vm1294 = vcmask 589312
      %v1295 = vsel %vm1294, %v1293, %v1288
      %v1296 = vadd.s32 %v1235, 4294967224
      %v1297 = vlaneseq
      %v1298 = vshrl.u32 %v1297, 7
      %v1299 = vsub.s32 %v1296, %v1298
      %v1300 = vrot.slane %v1205, %v1299
      %vm1301 = vcmask 654912
      %v1302 = vsel %vm1301, %v1300, %v1295
      %v1303 = vadd.s32 %v1235, 4294967216
      %v1304 = vlaneseq
      %v1305 = vshrl.u32 %v1304, 7
      %v1306 = vsub.s32 %v1303, %v1305
      %v1307 = vrot.slane %v1207, %v1306
      %vm1308 = vcmask 720512
      %v1309 = vsel %vm1308, %v1307, %v1302
      %v1310 = vadd.s32 %v1235, 4294967208
      %v1311 = vlaneseq
      %v1312 = vshrl.u32 %v1311, 7
      %v1313 = vsub.s32 %v1310, %v1312
      %v1314 = vrot.slane %v1209, %v1313
      %vm1315 = vcmask 786112
      %v1316 = vsel %vm1315, %v1314, %v1309
      %v1317 = vadd.s32 %v1235, 4294967200
      %v1318 = vlaneseq
      %v1319 = vshrl.u32 %v1318, 7
      %v1320 = vsub.s32 %v1317, %v1319
      %v1321 = vrot.slane %v1211, %v1320
      %vm1322 = vcmask 851712
      %v1323 = vsel %vm1322, %v1321, %v1316
      %v1324 = vadd.s32 %v1235, 4294967192
      %v1325 = vlaneseq
      %v1326 = vshrl.u32 %v1325, 7
      %v1327 = vsub.s32 %v1324, %v1326
      %v1328 = vrot.slane %v1213, %v1327
      %vm1329 = vcmask 917312
      %v1330 = vsel %vm1329, %v1328, %v1323
      %v1331 = vadd.s32 %v1235, 4294967184
      %v1332 = vlaneseq
      %v1333 = vshrl.u32 %v1332, 7
      %v1334 = vsub.s32 %v1331, %v1333
      %v1335 = vrot.slane %v1215, %v1334
      %vm1336 = vcmask 982912
      %v1337 = vsel %vm1336, %v1335, %v1330
      %v1338 = vadd.s32 %v1235, 4294967176
      %v1339 = vlaneseq
      %v1340 = vshrl.u32 %v1339, 7
      %v1341 = vsub.s32 %v1338, %v1340
      %v1342 = vrot.slane %v1217, %v1341
      %vm1343 = vcmask 1048512
      %v1344 = vsel %vm1343, %v1342, %v1337
      %1346 = vst [vmem:[#allocation8] sm:$0x1] %v1344
    $region25: #{tpu_custom_call.1} parent=1 // pred_fallthru
      _
    // Predicated region
    $region26: #{tpu_custom_call.1} parent=1 // pred_check
      _
    $region27: #{tpu_custom_call.1} parent=1 // pred_check_branch
      %1348 = sbr.rel (0) target = $region29
    $region28: #{tpu_custom_call.1} parent=1 // pred_region
      %s1350 = ssub.s32 16, 16
      %1351 = vsyncadd [#allocation5], %s1350
      %s1353 = sshll.u32 [#allocation8], 4
      %s1354 = int_to_ptr.vmem [resolvable:$true] %s1353
      %1356 = dma.vmem_to_hbm [thread:$0]  %s1354, 16, %s2, [#allocation5]
    $region29: #{tpu_custom_call.1} parent=1 // pred_fallthru
      _
    // Predicated region
    $region30: #{tpu_custom_call.1} parent=1 // pred_check
      _
    $region31: #{tpu_custom_call.1} parent=1 // pred_check_branch
      %1358 = sbr.rel (0) target = $region33
    $region32: #{tpu_custom_call.1} parent=1 // pred_region
      %1359 = dma.done [#allocation5], 16
    $region33: #{tpu_custom_call.1} parent=1 // pred_fallthru
      _
    %1360 = vsyncpa [#allocation4], 1
    %1361 = vsyncpa [#allocation7], 1
    %1362 = vsyncpa [#allocation5], 1

</llo_original>
